<compile_context>
chip_gen: v7x
topology: tpu7x:2x2x1
jax: 0.10.0
libtpu: 0.0.40
codegen_flags: <defaults>
</compile_context>

<pallas_src>
import functools

import jax
import jax.numpy as jnp
from jax.experimental import pallas as pl
from jax.experimental.pallas import tpu as pltpu

EPS = 1e-12  # torch.nn.functional.normalize default eps


# ---------------------------------------------------------------------------
# Pallas kernel: one (layer, batch-tile) grid step of the cosine similarity.
# ---------------------------------------------------------------------------
def _cos_sim_kernel(x_ref, nkt_ref, o_ref):
    # x_ref  : (Bt, D)  f32   queries for one layer / one batch tile
    # nkt_ref: (D, P)   bf16  L2-normalized keys, pre-transposed (MXU-ready RHS)
    # o_ref  : (Bt, P)  f32   cosine similarities
    x = x_ref[...]
    sq = jnp.sum(x * x, axis=-1, keepdims=True)                    # VPU, f32
    q = x * jax.lax.rsqrt(jnp.maximum(sq, EPS * EPS))               # EUP rsqrt, f32
    o_ref[...] = jnp.dot(q.astype(nkt_ref.dtype), nkt_ref[...],     # MXU, f32 acc
                         preferred_element_type=jnp.float32)


def cos_sim_pallas(x_lm, nk_t, *, b_tile=512):
    """x_lm: (nL, B, D) f32, nk_t: (nL, D, P) float -> cos: (nL, B, P) f32."""
    nL, B, D = x_lm.shape
    _, _, P = nk_t.shape
    bt = B if B <= b_tile else b_tile          # full-B block for small batches
    nk_bf16 = nk_t.astype(jnp.bfloat16)        # hoisted parameter-only cast

    grid = (nL, pl.cdiv(B, bt))
    block_bytes = 4 * bt * D + 2 * D * P + 4 * bt * P
    vmem_limit = int(min(max(4 * block_bytes, 16 << 20), 48 << 20))
    cost = pl.CostEstimate(
        flops=2 * nL * B * P * D,
        transcendentals=nL * B,                                    # rsqrt per row
        bytes_accessed=4 * nL * B * D + 2 * nL * D * P + 4 * nL * B * P)

    # NOTE: output last dim is the pool size (< 128 lanes -> masked stores). At
    # production B (>= 128) a lane-dense (nL, P, B) output + wrapper transpose is the
    # cheaper store-side layout, but it would require transposing q; the output here
    # is tiny relative to the inputs, so keep the natural (nL, B, P).
    return pl.pallas_call(
        _cos_sim_kernel,
        out_shape=jax.ShapeDtypeStruct((nL, B, P), jnp.float32),
        grid_spec=pltpu.PrefetchScalarGridSpec(
            num_scalar_prefetch=0,
            grid=grid,
            in_specs=[
                pl.BlockSpec((None, bt, D), lambda l, b: (l, b, 0)),
                pl.BlockSpec((None, D, P), lambda l, b: (l, 0, 0)),
            ],
            out_specs=pl.BlockSpec((None, bt, P), lambda l, b: (l, b, 0)),
        ),
        compiler_params=pltpu.CompilerParams(
            dimension_semantics=("parallel", "parallel"),
            vmem_limit_bytes=vmem_limit),
        cost_estimate=cost,
    )(x_lm, nk_bf16)


# ---------------------------------------------------------------------------
# custom_vjp so the training pull-loss gradient flows into the key prompts.
# ---------------------------------------------------------------------------
@jax.custom_vjp
def cos_sim(x_lm, nk_t):
    return cos_sim_pallas(x_lm, nk_t)


def _cos_sim_fwd(x_lm, nk_t):
    return cos_sim_pallas(x_lm, nk_t), (x_lm, nk_t)


def _cos_sim_bwd(res, g):
    # Backward is two tiny contractions + the normalize VJP — plain JAX.
    x_lm, nk_t = res
    sq = jnp.sum(x_lm * x_lm, axis=-1, keepdims=True)
    inv = jax.lax.rsqrt(jnp.maximum(sq, EPS * EPS))
    q = x_lm * inv                                                  # (nL, B, D)
    d_nk_t = jnp.einsum('lbd,lbp->ldp', q, g)                       # (nL, D, P)
    d_q = jnp.einsum('lbp,ldp->lbd', g, nk_t)
    d_x = (d_q - q * jnp.sum(q * d_q, axis=-1, keepdims=True)) * inv
    return d_x, d_nk_t


cos_sim.defvjp(_cos_sim_fwd, _cos_sim_bwd)


# ---------------------------------------------------------------------------
# Plain-JAX glue (parameter-only / gather work).
# ---------------------------------------------------------------------------
def _l2_normalize(t, axis=-1):
    sq = jnp.sum(t * t, axis=axis, keepdims=True)
    return t * jax.lax.rsqrt(jnp.maximum(sq, EPS * EPS))


def ortho_penalty(t):
    n = t.shape[0]
    return jnp.mean((t @ t.T - jnp.eye(n, dtype=t.dtype)) ** 2) * 1e-6


def l2ppp_mask_attn_forward(params, x_query, *, train, task_count, top_k,
                            cos_mu, ortho_mu):
    """Forward of L2PppMaskAttn. Returns (p_return (nL,B,Lp,emb_d), p_loss scalar)."""
    K_all, A_all, P_all = params["K"], params["A"], params["P"]
    B, nL, D = x_query.shape
    _, Pp, Lp, emb_d = P_all.shape

    # --- parameter-only precompute (hoisted out of the kernel) ---
    nK_all = _l2_normalize(K_all)                       # (nL, P, D)
    nA_all = _l2_normalize(A_all)                       # (nL, P, D)
    w_pool = jnp.sum(nK_all * nA_all, axis=-1)          # (nL, P): a_k per pool entry
    nK_t = jnp.swapaxes(nK_all, 1, 2)                   # (nL, D, P): MXU-ready RHS
    prompt_flat = P_all.reshape(nL, Pp, Lp * emb_d)     # (nL, P, Lp*emb_d)

    # --- layout plumbing: layer-major queries for tile-aligned kernel blocks ---
    x_lm = jnp.swapaxes(x_query, 0, 1)                  # (nL, B, D)

    # Hot path: cosine similarity (Pallas). q is detached in the reference; K's
    # gradient flows through the custom VJP + the plain-JAX normalize/transpose.
    # (For toy sizes a plain einsum would match this; kept on the Pallas path here.)
    cos = cos_sim(jax.lax.stop_gradient(x_lm), nK_t)    # (nL, B, P)

    s = int(task_count) * int(top_k)
    f = s + int(top_k)

    if train:
        p_loss = jnp.sum(1.0 - cos[:, :, s:f]) * cos_mu
        orth = 0.0
        for l in range(nL):
            orth = orth + ortho_penalty(K_all[l, s:f])
            orth = orth + ortho_penalty(A_all[l, s:f])
            orth = orth + ortho_penalty(P_all[l, s:f].reshape(top_k, Lp * emb_d))
        p_loss = p_loss + orth * ortho_mu

        w_sel = w_pool[:, s:f]                                          # (nL, topk)
        p_layer = jnp.einsum('lk,lke->le', w_sel, prompt_flat[:, s:f])  # (nL, Lp*emb_d)
        p_return = jnp.broadcast_to(p_layer[:, None, :], (nL, B, Lp * emb_d))
        return p_return.reshape(nL, B, Lp, emb_d), p_loss
    else:
        _, idx = jax.lax.top_k(cos, top_k)                              # (nL, B, topk)
        sel = jnp.sum(jax.nn.one_hot(idx, Pp, dtype=cos.dtype), axis=2)  # (nL, B, P)
        w = sel * w_pool[:, None, :]                                    # (nL, B, P)
        p_return = jnp.einsum('lbp,lpe->lbe', w, prompt_flat)           # (nL,B,Lp*emb_d)
        return p_return.reshape(nL, B, Lp, emb_d), jnp.asarray(0.0, cos.dtype)


if __name__ == "__main__":
    # Small deterministic config (C == key_d, as the module's forward assumes)
    B = 8
    nL = 2            # num_layers
    key_d = 128
    emb_d = 32
    pool_size = 8     # e_pool_size
    Lp = 4            # e_p_length (num_prompts)
    top_k = 2
    task_count = 0
    cos_mu, ortho_mu = 1.0, 0.1   # loss_weight = (cos_mu, ortho_mu)

    root = jax.random.PRNGKey(0)
    kx, ka, kk, kp = jax.random.split(root, 4)
    x_query = jax.random.normal(kx, (B, nL, key_d), jnp.float32)
    # TODO(synk): nn.init.orthogonal_ parameter init and the vis_period heatmap
    # logging are init-time / host-side visualization concerns, not forward math.
    params = {
        "K": jax.random.normal(kk, (nL, pool_size, key_d), jnp.float32),
        "A": jax.random.normal(ka, (nL, pool_size, key_d), jnp.float32),
        "P": jax.random.normal(kp, (nL, pool_size, Lp, emb_d), jnp.float32),
    }

    # --- sanity check the Pallas cos_sim against a pure-JAX f32 reference ---
    nK_ref = _l2_normalize(params["K"])
    q_ref = _l2_normalize(x_query)
    cos_ref = jnp.einsum('bld,lpd->lbp', q_ref, nK_ref,
                         precision=jax.lax.Precision.HIGHEST)
    cos_ker = cos_sim_pallas(jnp.swapaxes(x_query, 0, 1),
                             jnp.swapaxes(nK_ref, 1, 2))
    jax.block_until_ready(cos_ker)
    assert cos_ker.shape == (nL, B, pool_size)
    # bf16 MXU operands with f32 accumulation -> slightly looser tolerance
    assert jnp.allclose(cos_ker, cos_ref, atol=2e-2), "cos_sim kernel mismatch"

    # --- gradient flows into K through the custom VJP (training pull loss) ---
    def pull_loss(Kp):
        nKt = jnp.swapaxes(_l2_normalize(Kp), 1, 2)
        c = cos_sim(jax.lax.stop_gradient(jnp.swapaxes(x_query, 0, 1)), nKt)
        return jnp.sum(1.0 - c[:, :, :top_k])

    gK = jax.grad(pull_loss)(params["K"])
    jax.block_until_ready(gK)
    assert gK.shape == params["K"].shape
    assert bool(jnp.all(jnp.isfinite(gK))) and bool(jnp.any(gK != 0.0))

    fwd_train = jax.jit(functools.partial(
        l2ppp_mask_attn_forward, train=True, task_count=task_count,
        top_k=top_k, cos_mu=cos_mu, ortho_mu=ortho_mu))
    fwd_eval = jax.jit(functools.partial(
        l2ppp_mask_attn_forward, train=False, task_count=task_count,
        top_k=top_k, cos_mu=cos_mu, ortho_mu=ortho_mu))

    # training path
    prompts_tr, p_loss = fwd_train(params, x_query)
    jax.block_until_ready(prompts_tr)
    jax.block_until_ready(p_loss)
    assert prompts_tr.shape == (nL, B, Lp, emb_d)
    assert p_loss.shape == ()

    # eval path
    prompts_ev, p_loss_ev = fwd_eval(params, x_query)
    jax.block_until_ready(prompts_ev)
    assert prompts_ev.shape == (nL, B, Lp, emb_d)

    print("KERNEL_OK")
</pallas_src>

<mosaic_0001>
module attributes {stable_mosaic.version = 11 : i64} {
  func.func @_cos_sim_kernel(%arg0: i32, %arg1: i32, %arg2: memref<1x8x128xf32, #tpu.memory_space<vmem>>, %arg3: memref<1x128x8xbf16, #tpu.memory_space<vmem>>, %arg4: memref<1x8x8xf32, #tpu.memory_space<vmem>>) attributes {dimension_semantics = [#tpu.dimension_semantics<parallel>, #tpu.dimension_semantics<parallel>], iteration_bounds = array<i64: 2, 1>, scalar_prefetch = 0 : i64, scratch_operands = 0 : i64, tpu.core_type = #tpu.core_type<tc>, window_params = [{transform_indices = @transform_0, window_bounds = array<i64: 1, 8, 128>}, {transform_indices = @transform_1, window_bounds = array<i64: 1, 128, 8>}, {transform_indices = @transform_2, window_bounds = array<i64: 1, 8, 8>}]} {
    %c0 = arith.constant 0 : index
    %c0_0 = arith.constant 0 : index
    %c0_1 = arith.constant 0 : index
    %0 = vector.load %arg2[%c0, %c0_0, %c0_1] : memref<1x8x128xf32, #tpu.memory_space<vmem>>, vector<1x8x128xf32>
    %1 = vector.shape_cast %0 : vector<1x8x128xf32> to vector<8x128xf32>
    %2 = arith.mulf %1, %1 : vector<8x128xf32>
    %cst = arith.constant dense<0.000000e+00> : vector<8xf32>
    %3 = vector.multi_reduction <add>, %2, %cst [1] : vector<8x128xf32> to vector<8xf32>
    %4 = vector.shape_cast %3 : vector<8xf32> to vector<8x1xf32>
    %cst_2 = arith.constant 1.000000e-24 : f32
    %5 = vector.broadcast %cst_2 : f32 to vector<8x1xf32>
    %6 = arith.maximumf %4, %5 : vector<8x1xf32>
    %7 = math.rsqrt %6 : vector<8x1xf32>
    %8 = vector.broadcast %7 : vector<8x1xf32> to vector<8x128xf32>
    %9 = arith.mulf %1, %8 : vector<8x128xf32>
    %10 = arith.truncf %9 : vector<8x128xf32> to vector<8x128xbf16>
    %c0_3 = arith.constant 0 : index
    %c0_4 = arith.constant 0 : index
    %c0_5 = arith.constant 0 : index
    %11 = vector.load %arg3[%c0_3, %c0_4, %c0_5] : memref<1x128x8xbf16, #tpu.memory_space<vmem>>, vector<1x128x8xbf16>
    %12 = vector.shape_cast %11 : vector<1x128x8xbf16> to vector<128x8xbf16>
    %cst_6 = arith.constant dense<0.000000e+00> : vector<8x8xf32>
    %13 = tpu.matmul %10, %12, %cst_6 {dimension_numbers = #tpu.dot_dimension_numbers<[1], [0], [0], [1], [0, 0, 1, 1], [], []>} : vector<8x128xbf16>, vector<128x8xbf16>, vector<8x8xf32> -> vector<8x8xf32>
    %c0_7 = arith.constant 0 : index
    %c0_8 = arith.constant 0 : index
    %c0_9 = arith.constant 0 : index
    %14 = vector.load %arg4[%c0_7, %c0_8, %c0_9] : memref<1x8x8xf32, #tpu.memory_space<vmem>>, vector<1x8x8xf32>
    %15 = vector.shape_cast %14 : vector<1x8x8xf32> to vector<8x8xf32>
    %16 = vector.shape_cast %13 : vector<8x8xf32> to vector<1x8x8xf32>
    tpu.vector_store %arg4[%c0_7, %c0_8, %c0_9], %16 {strides = array<i32>} : memref<1x8x8xf32, #tpu.memory_space<vmem>>, vector<1x8x8xf32>,
    return
  }
  func.func @transform_0(%arg0: i32, %arg1: i32) -> (i32, i32, i32) {
    %c0_i32 = arith.constant 0 : i32
    %c0_i32_0 = arith.constant 0 : i32
    return %arg0, %arg1, %c0_i32 : i32, i32, i32
  }
  func.func @transform_1(%arg0: i32, %arg1: i32) -> (i32, i32, i32) {
    %c0_i32 = arith.constant 0 : i32
    %c0_i32_0 = arith.constant 0 : i32
    %c0_i32_1 = arith.constant 0 : i32
    return %arg0, %c0_i32, %c0_i32_0 : i32, i32, i32
  }
  func.func @transform_2(%arg0: i32, %arg1: i32) -> (i32, i32, i32) {
    %c0_i32 = arith.constant 0 : i32
    %c0_i32_0 = arith.constant 0 : i32
    return %arg0, %arg1, %c0_i32 : i32, i32, i32
  }
}

</mosaic_0001>

<llo_original>
// kernel: tpu_custom_call.1
$region0: #{tpu_custom_call.1}
  #allocation0 [shape = 'u32[]', space=smem, size = 0x4, offset = 0x4, fixed_abs, tag = 'smem constant byte address 0x4 - core index']
  #allocation1 [shape = 'u32[144,128]{1,0:T(1,128)}', space=vmem, size = 0x12000, scoped, tag = 'internal scratch']
  %s0 = inlined_call_operand.vmem [shape: f32[2,8,128], index: 0, kind: input, shape index: {}]
  %s1 = inlined_call_operand.vmem [shape: bf16[2,128,8], index: 1, kind: input, shape index: {}]
  %s2 = inlined_call_operand.hbm [shape: f32[2,8,8], index: 2, kind: output, shape index: {}]
  %s3 = sld [smem:[#allocation0]]
  $region41: #{tpu_custom_call.1} parent=0
    _
  %s5 = ssub.s32 1, %s3
  %s6 = scalar_select 0, %s5, %s3
  $region1: #{tpu_custom_call.1} parent=0
    #allocation2 [shape = 'u8[8192]{0}', space=vmem, size = 0x2000, scoped, tag = 'output window, operand 0']
    #allocation3 [shape = 's32[2]{0}', space=sflag, size = 0x8, scoped, tag = 'scoped memory for tpu_custom_call.1']
    %7 = vsyncpa [#allocation3], 0
    %s8 = scalar_lea.sflag [#allocation3], 1
    %9 = vsyncpa %s8, 0
    loop: start=0, step=1, limit=4
    $region2: #{tpu_custom_call.1} parent=1 // loop_pre_header
      _
    $region3: #{tpu_custom_call.1} parent=1 // loop_header
      %s11 = sphi 0, %s15
      %p12 = scmp.ge.s32.totalorder %s11, 4
      %s18 = sphi 0, %s30
      %s19 = sphi 0, %s26
      %s20 = sphi 0, %s18
      %s21 = sphi 0, %s19
      %s22 = sphi 0, %s20
      %s23 = sphi 0, %s21
      %s35 = sphi 0, %s37
      %s38 = sphi 0, %s35
      %s39 = sphi 0, %s38
      %s55 = sphi 0, %s39
      %s61 = sphi 0, %s63
      %s64 = sphi 0, %s61
      %s65 = sphi 0, %s64
      %s81 = sphi 0, %s65
      %s89 = sphi 0, %s91
      %s92 = sphi 0, %s89
      %s93 = sphi 0, %s92
      %s109 = sphi 0, %s93
    $region4: #{tpu_custom_call.1} parent=1 // loop_header_branch
      %14 = sbr.rel (%p12) target = $region8
    $region5: #{tpu_custom_call.1} parent=1 // loop_body
      %s16 = ssub.s32 %s11, 1
      %s17 = ssub.s32 %s11, 2
      %s24 = sadd.s32 1, %s19
      %p25 = scmp.ge.s32.totalorder %s24, 1
      %s26 = scalar_select %p25, 0, %s24
      %s27 = sadd.s32 1, %s18
      %s28 = scalar_select %p25, %s27, %s18
      %p29 = scmp.ge.s32.totalorder %s28, 2
      %s30 = scalar_select %p29, 0, %s28
      %s31 = ssub.s32 %s18, %s30
      %s32 = ssub.s32 %s19, %s26
      %s33 = sor.u32 %s31, %s32
      %p34 = scmp.eq.s32.totalorder %s33, 0
      %s36 = sadd.s32 %s35, 1
      %s37 = scalar_select %p34, %s35, %s36
      %p40 = pneg %p34
      %p41 = scmp.eq.s32.totalorder %s11, 1
      %p42 = por %p40, %p41
      %p43 = scmp.ne.s32.totalorder %s35, %s38
      %p44 = scmp.eq.s32.totalorder %s11, 0
      %p45 = por %p43, %p44
      %p46 = scmp.ne.s32.totalorder %s35, %s38
      %p47 = scmp.eq.s32.totalorder %s16, 1
      %p48 = por %p46, %p47
      %p49 = scmp.ne.s32.totalorder %s38, %s39
      %p50 = scmp.eq.s32.totalorder %s16, 0
      %p51 = por %p49, %p50
      %p52 = scmp.ne.s32.totalorder %s38, %s39
      %p53 = scmp.eq.s32.totalorder %s17, 1
      %p54 = por %p52, %p53
      %p56 = scmp.ne.s32.totalorder %s39, %s55
      %p57 = scmp.eq.s32.totalorder %s17, 0
      %p58 = por %p56, %p57
      %s59 = ssub.s32 %s18, %s30
      %p60 = scmp.eq.s32.totalorder %s59, 0
      %s62 = sadd.s32 %s61, 1
      %s63 = scalar_select %p60, %s61, %s62
      %p66 = pneg %p60
      %p67 = scmp.eq.s32.totalorder %s11, 1
      %p68 = por %p66, %p67
      %p69 = scmp.ne.s32.totalorder %s61, %s64
      %p70 = scmp.eq.s32.totalorder %s11, 0
      %p71 = por %p69, %p70
      %p72 = scmp.ne.s32.totalorder %s61, %s64
      %p73 = scmp.eq.s32.totalorder %s16, 1
      %p74 = por %p72, %p73
      %p75 = scmp.ne.s32.totalorder %s64, %s65
      %p76 = scmp.eq.s32.totalorder %s16, 0
      %p77 = por %p75, %p76
      %p78 = scmp.ne.s32.totalorder %s64, %s65
      %p79 = scmp.eq.s32.totalorder %s17, 1
      %p80 = por %p78, %p79
      %p82 = scmp.ne.s32.totalorder %s65, %s81
      %p83 = scmp.eq.s32.totalorder %s17, 0
      %p84 = por %p82, %p83
      %s85 = ssub.s32 %s18, %s30
      %s86 = ssub.s32 %s19, %s26
      %s87 = sor.u32 %s85, %s86
      %p88 = scmp.eq.s32.totalorder %s87, 0
      %s90 = sadd.s32 %s89, 1
      %s91 = scalar_select %p88, %s89, %s90
      %p94 = pneg %p88
      %p95 = scmp.eq.s32.totalorder %s11, 1
      %p96 = por %p94, %p95
      %p97 = scmp.ne.s32.totalorder %s89, %s92
      %p98 = scmp.eq.s32.totalorder %s11, 0
      %p99 = por %p97, %p98
      %p100 = scmp.ne.s32.totalorder %s89, %s92
      %p101 = scmp.eq.s32.totalorder %s16, 1
      %p102 = por %p100, %p101
      %p103 = scmp.ne.s32.totalorder %s92, %s93
      %p104 = scmp.eq.s32.totalorder %s16, 0
      %p105 = por %p103, %p104
      %p106 = scmp.ne.s32.totalorder %s92, %s93
      %p107 = scmp.eq.s32.totalorder %s17, 1
      %p108 = por %p106, %p107
      %p110 = scmp.ne.s32.totalorder %s93, %s109
      %p111 = scmp.eq.s32.totalorder %s17, 0
      %p112 = por %p110, %p111
      %p113 = scmp.le.s32.totalorder 1, %s11
      %p114 = scmp.lt.s32.totalorder %s11, 3
      %p115 = pnand %p113, %p114
      %p116 = pneg %p115
      // Predicated region
      $region9: #{tpu_custom_call.1} parent=5 // pred_check
        _
      $region10: #{tpu_custom_call.1} parent=5 // pred_check_branch
        %118 = sbr.rel (%p115) target = $region12
      $region11: #{tpu_custom_call.1} parent=5 // pred_region
        %s119 = ssub.s32 %s11, 1
      $region12: #{tpu_custom_call.1} parent=5 // pred_fallthru
        _
      %p120 = scmp.lt.s32.totalorder %s11, 2
      // Predicated region
      $region13: #{tpu_custom_call.1} parent=5 // pred_check
        %p121 = pneg %p120
      $region14: #{tpu_custom_call.1} parent=5 // pred_check_branch
        %123 = sbr.rel (%p121) target = $region16
      $region15: #{tpu_custom_call.1} parent=5 // pred_region
        // Predicated region
        $region17: #{tpu_custom_call.1} parent=15 // pred_check
          %p124 = pneg %p45
        $region18: #{tpu_custom_call.1} parent=15 // pred_check_branch
          %126 = sbr.rel (%p124) target = $region20
        $region19: #{tpu_custom_call.1} parent=15 // pred_region
          %p127 = scmp.lt.s32.totalorder %s18, 1
          %s128 = scalar_select %p127, %s18, 1
          %p129 = scmp.lt.s32.totalorder %s19, 0
          %s130 = scalar_select %p129, %s19, 0
          %s131 = sadd.s32 %s130, %s128
          %s132 = smul.addr %s131, 8
          %s133 = scalar_lea.vmem %s0, %s132
        $region20: #{tpu_custom_call.1} parent=15 // pred_fallthru
          _
        // Predicated region
        $region21: #{tpu_custom_call.1} parent=15 // pred_check
          %p134 = pneg %p71
        $region22: #{tpu_custom_call.1} parent=15 // pred_check_branch
          %136 = sbr.rel (%p134) target = $region24
        $region23: #{tpu_custom_call.1} parent=15 // pred_region
          %p137 = scmp.lt.s32.totalorder %s18, 1
          %s138 = scalar_select %p137, %s18, 1
          %s139 = smul.addr %s138, 16
          %s140 = smul.addr %s139, 4
          %s141 = scalar_lea.vmem %s1, %s140
        $region24: #{tpu_custom_call.1} parent=15 // pred_fallthru
          _
      $region16: #{tpu_custom_call.1} parent=5 // pred_fallthru
        _
      %p142 = scmp.le.s32.totalorder 1, %s11
      %p143 = scmp.lt.s32.totalorder %s11, 3
      %p144 = pnand %p142, %p143
      %p145 = pneg %p144
      // Predicated region
      $region25: #{tpu_custom_call.1} parent=5 // pred_check
        _
      $region26: #{tpu_custom_call.1} parent=5 // pred_check_branch
        %147 = sbr.rel (%p144) target = $region28
      $region27: #{tpu_custom_call.1} parent=5 // pred_region
        %s148 = ssub.s32 %s11, 1
        %p149 = scmp.lt.s32.totalorder %s20, 1
        %s150 = scalar_select %p149, %s20, 1
        %p151 = scmp.lt.s32.totalorder %s21, 0
        %s152 = scalar_select %p151, %s21, 0
        %s153 = sadd.s32 %s152, %s150
        %s154 = smul.addr %s153, 8
        %s155 = scalar_lea.vmem %s0, %s154
        %p156 = pneg %p51
        %p157 = pneg %p48
        %p158 = scmp.lt.s32.totalorder %s20, 1
        %s159 = scalar_select %p158, %s20, 1
        %s160 = smul.addr %s159, 16
        %s161 = smul.addr %s160, 4
        %s162 = scalar_lea.vmem %s1, %s161
        %p163 = pneg %p77
        %p164 = pneg %p74
        %p165 = pneg %p105
        %p166 = pneg %p102
        %s167 = sand.u32 %s92, 1
        %s168 = scalar_lea.sflag [#allocation3], %s167
        %s169 = sand.u32 %s92, 1
        %s170 = smul.addr %s169, 8
        %s171 = scalar_lea.vmem [#allocation2], %s170
        %p172 = scmp.lt.s32.totalorder %s20, 1
        %s173 = scalar_select %p172, %s20, 1
        %p174 = scmp.lt.s32.totalorder %s21, 0
        %s175 = scalar_select %p174, %s21, 0
        %s176 = sadd.s32 %s175, %s173
        %s177 = smul.addr %s176, 8
        %s178 = scalar_lea.vmem %s0, %s177
        %p179 = scmp.lt.s32.totalorder %s20, 1
        %s180 = scalar_select %p179, %s20, 1
        %s181 = smul.addr %s180, 16
        %s182 = smul.addr %s181, 4
        %s183 = scalar_lea.vmem %s1, %s182
        %v185 = vld [vmem:[%s178] sm:$0xff]
        %v186 = vmul.f32 %v185, %v185
        %187 = vadd.xlane.f32.xlu0 %v186
        %v188 = vpop.xlane.xlu0 %187
        %v189 = vmax.f32 %v188, 1e-24
        %v190 = vrsqrt.pop %v189
        %v191 = vmul.f32 %v185, %v190
        %v192 = vpack.c.bf16 %v191, %v191
        %v193 = vld [vmem:[%s183] sm:$0xf]
        %v194 = vld [vmem:[%s183 + $0x4] sm:$0xf]
        %v195 = vld [vmem:[%s183 + $0x8] sm:$0xf]
        %v196 = vld [vmem:[%s183 + $0xc] sm:$0xf]
        %v197 = vld [vmem:[%s183 + $0x10] sm:$0xf]
        %v198 = vld [vmem:[%s183 + $0x14] sm:$0xf]
        %v199 = vld [vmem:[%s183 + $0x18] sm:$0xf]
        %v200 = vld [vmem:[%s183 + $0x1c] sm:$0xf]
        %v201 = vld [vmem:[%s183 + $0x20] sm:$0xf]
        %v202 = vld [vmem:[%s183 + $0x24] sm:$0xf]
        %v203 = vld [vmem:[%s183 + $0x28] sm:$0xf]
        %v204 = vld [vmem:[%s183 + $0x2c] sm:$0xf]
        %v205 = vld [vmem:[%s183 + $0x30] sm:$0xf]
        %v206 = vld [vmem:[%s183 + $0x34] sm:$0xf]
        %v207 = vld [vmem:[%s183 + $0x38] sm:$0xf]
        %v208 = vld [vmem:[%s183 + $0x3c] sm:$0xf]
        %v225 = vunpack.c.l.b16 %v193
        %v226 = vunpack.c.l.b16 %v194
        %v227 = vunpack.c.l.b16 %v195
        %v228 = vunpack.c.l.b16 %v196
        %v229 = vunpack.c.l.b16 %v197
        %v230 = vunpack.c.l.b16 %v198
        %v231 = vunpack.c.l.b16 %v199
        %v232 = vunpack.c.l.b16 %v200
        %v233 = vunpack.c.l.b16 %v201
        %v234 = vunpack.c.l.b16 %v202
        %v235 = vunpack.c.l.b16 %v203
        %v236 = vunpack.c.l.b16 %v204
        %v237 = vunpack.c.l.b16 %v205
        %v238 = vunpack.c.l.b16 %v206
        %v239 = vunpack.c.l.b16 %v207
        %v240 = vunpack.c.l.b16 %v208
        %v241 = vpack.c.b16 %v226, %v225
        %v242 = vpack.c.b16 %v228, %v227
        %v243 = vpack.c.b16 %v230, %v229
        %v244 = vpack.c.b16 %v232, %v231
        %v245 = vpack.c.b16 %v234, %v233
        %v246 = vpack.c.b16 %v236, %v235
        %v247 = vpack.c.b16 %v238, %v237
        %v248 = vpack.c.b16 %v240, %v239
        %257 = vmatprep.subr.bf16.mxu0 0
        %258 = vmatpush1.bf16.msra.mxu0 %v241
        %259 = vmatprep.subr.bf16.mxu0 0
        %260 = vmatpush1.bf16.msra.mxu0 %v242
        %261 = vmatprep.subr.bf16.mxu0 0
        %262 = vmatpush1.bf16.msra.mxu0 %v243
        %263 = vmatprep.subr.bf16.mxu0 0
        %264 = vmatpush1.bf16.msra.mxu0 %v244
        %265 = vmatprep.subr.bf16.mxu0 0
        %266 = vmatpush1.bf16.msra.mxu0 %v245
        %267 = vmatprep.subr.bf16.mxu0 0
        %268 = vmatpush1.bf16.msra.mxu0 %v246
        %269 = vmatprep.subr.bf16.mxu0 0
        %270 = vmatpush1.bf16.msra.mxu0 %v247
        %271 = vmatprep.subr.bf16.mxu0 0
        %272 = vmatpush1.bf16.msra.mxu0 %v248
        %273 = vmatprep.subr.bf16.mxu0 0
        %274 = vmatpush1.bf16.msra.mxu0 0
        %275 = vmatprep.subr.bf16.mxu0 0
        %276 = vmatpush1.bf16.msra.mxu0 0
        %277 = vmatprep.subr.bf16.mxu0 0
        %278 = vmatpush1.bf16.msra.mxu0 0
        %279 = vmatprep.subr.bf16.mxu0 0
        %280 = vmatpush1.bf16.msra.mxu0 0
        %281 = vmatprep.subr.bf16.mxu0 0
        %282 = vmatpush1.bf16.msra.mxu0 0
        %283 = vmatprep.subr.bf16.mxu0 0
        %284 = vmatpush1.bf16.msra.mxu0 0
        %285 = vmatprep.subr.bf16.mxu0 0
        %286 = vmatpush1.bf16.msra.mxu0 0
        %287 = vmatprep.subr.bf16.mxu0 0
        %288 = vmatpush1.bf16.msra.mxu0 0
        %289 = vmatprep.mubr.bf16.mxu0 0
        %290 = vmatmul.mubr.bf16.gmra.mrb[0].mxu0 %v192
        %v291 = vpop.f32.mrb[0].mxu0
        %v292 = vadd.f32 0.0, %v291
        %v293 = vpop.f32.mrb[0].mxu0
        %v294 = vpop.f32.mrb[0].mxu0
        %v295 = vpop.f32.mrb[0].mxu0
        %296 = vdwg.mxu0
        %vm297 = vcmask 64512
        %298 = vst.msk [vmem:[%s171] sm:$0xff] %vm297, %v292
        %s299 = sand.u32 %s92, 1
        %s300 = scalar_lea.sflag [#allocation3], %s299
        %s301 = sand.u32 %s92, 1
        %s302 = smul.addr %s301, 8
        %s303 = scalar_lea.vmem [#allocation2], %s302
        // Predicated region
        $region29: #{tpu_custom_call.1} parent=27 // pred_check
          %p304 = pneg %p102
        $region30: #{tpu_custom_call.1} parent=27 // pred_check_branch
          %306 = sbr.rel (%p304) target = $region32
        $region31: #{tpu_custom_call.1} parent=27 // pred_region
          %s308 = ssub.s32 128, 128
          %309 = vsyncadd %s300, %s308
          %s310 = sadd.s32 %s21, %s20
          %s311 = smul.addr %s310, 128
          %s312 = scalar_lea.hbm %s2, %s311
          %s314 = sshll.u32 %s303, 4
          %s315 = int_to_ptr.vmem [resolvable:$true] %s314
          %317 = dma.vmem_to_hbm [thread:$0]  %s315, 128, %s312, %s300
        $region32: #{tpu_custom_call.1} parent=27 // pred_fallthru
          _
      $region28: #{tpu_custom_call.1} parent=5 // pred_fallthru
        _
      %p318 = scmp.le.s32.totalorder 2, %s11
      // Predicated region
      $region33: #{tpu_custom_call.1} parent=5 // pred_check
        %p319 = pneg %p318
      $region34: #{tpu_custom_call.1} parent=5 // pred_check_branch
        %321 = sbr.rel (%p319) target = $region36
      $region35: #{tpu_custom_call.1} parent=5 // pred_region
        %s322 = ssub.s32 %s11, 2
        // Predicated region
        $region37: #{tpu_custom_call.1} parent=35 // pred_check
          %p323 = pneg %p108
        $region38: #{tpu_custom_call.1} parent=35 // pred_check_branch
          %325 = sbr.rel (%p323) target = $region40
        $region39: #{tpu_custom_call.1} parent=35 // pred_region
          %s326 = sand.u32 %s93, 1
          %s327 = scalar_lea.sflag [#allocation3], %s326
          %s328 = sand.u32 %s93, 1
          %s329 = smul.addr %s328, 8
          %s330 = scalar_lea.vmem [#allocation2], %s329
          %331 = dma.done %s327, 128
        $region40: #{tpu_custom_call.1} parent=35 // pred_fallthru
          _
      $region36: #{tpu_custom_call.1} parent=5 // pred_fallthru
        _
    $region6: #{tpu_custom_call.1} parent=1 // loop_footer
      %s15 = sadd.s32 1, %s11
    $region7: #{tpu_custom_call.1} parent=1 // loop_footer_branch
      %10 = sbr.rel target = $region3
    $region8: #{tpu_custom_call.1} parent=1 // loop_exit
      _
    %332 = vsyncpa [#allocation3], 1
    %s333 = scalar_lea.sflag [#allocation3], 1
    %334 = vsyncpa %s333, 1

</llo_original>
